<compile_context>
chip_gen: v5e
topology: v5e:2x2
jax: 0.10.0
libtpu: 0.0.40
codegen_flags: <defaults>
</compile_context>

<pallas_src>
import jax
import jax.numpy as jnp
from jax.experimental import pallas as pl
from jax.experimental.pallas import tpu as pltpu


def _linreg_kernel(w_ref, b_ref, x_ref, o_ref):
    # w_ref, b_ref: (1,) SMEM scalars; x_ref / o_ref: (tr, lane) VMEM tiles.
    # Single fused broadcast multiply-add on the VPU; one lane-dense store.
    o_ref[...] = (w_ref[0] * x_ref[...] + b_ref[0]).astype(o_ref.dtype)


def _round_up(n: int, m: int) -> int:
    return ((n + m - 1) // m) * m


def _sublane_multiple(dtype) -> int:
    # Minimum second-minor tile multiple: (8,128) f32, (16,128) bf16, (32,128) int8.
    return 8 * max(1, 4 // jnp.dtype(dtype).itemsize)


# Below this element count, XLA's fused elementwise beats any kernel launch.
_SMALL_N = 64 * 1024


def linear_regression(x: jax.Array, w: jax.Array, b: jax.Array) -> jax.Array:
    """y = w * x + b (elementwise broadcast) via a tiled, pipelined Pallas kernel."""
    orig_shape = x.shape
    n = int(x.size)
    if n == 0:
        return x

    # Small-input fast path (dominant win for course-sized inputs like (2000,1)).
    if n < _SMALL_N:
        return (w * x + b).astype(x.dtype)

    sub = _sublane_multiple(x.dtype)

    # Widest lane count dividing n -> reshape to (rows, lane) is free (no pad).
    lane_eff = None
    for cand in (1024, 512, 256, 128):
        if n % cand == 0:
            lane_eff = cand
            break

    flat = x.reshape(-1)
    if lane_eff is None:
        # TODO(synk): n not a multiple of 128 -> no free lane-dense 2-D view;
        # fall back to a padded copy + trailing slice (one extra HBM round trip).
        lane_eff = 1024
        rows = pl.cdiv(n, lane_eff)
        flat = jnp.pad(flat, (0, rows * lane_eff - n))
        needs_slice = True
    else:
        rows = n // lane_eff
        needs_slice = False

    x2d = flat.reshape(rows, lane_eff)

    # ~1M-element (4 MiB f32) tiles; double-buffered in+out = 16 MiB of VMEM.
    tr = min(max(sub, (1024 * 1024) // lane_eff), _round_up(rows, sub))
    # Keep >= 2 grid steps when possible so v7x's 2nd TensorCore gets work.
    if rows >= 2 * sub:
        tr = min(tr, _round_up(pl.cdiv(rows, 2), sub))

    grid = (pl.cdiv(rows, tr),)  # last block may be partial; Pallas masks it.

    itemsize = jnp.dtype(x.dtype).itemsize
    cost = pl.CostEstimate(flops=2 * n, transcendentals=0,
                           bytes_accessed=2 * n * itemsize)

    out2d = pl.pallas_call(
        _linreg_kernel,
        out_shape=jax.ShapeDtypeStruct((rows, lane_eff), x.dtype),
        grid=grid,
        in_specs=[
            pl.BlockSpec(memory_space=pltpu.SMEM),           # w  (1,)
            pl.BlockSpec(memory_space=pltpu.SMEM),           # b  (1,)
            pl.BlockSpec((tr, lane_eff), lambda i: (i, 0)),  # x row tile
        ],
        out_specs=pl.BlockSpec((tr, lane_eff), lambda i: (i, 0)),
        compiler_params=pltpu.CompilerParams(
            dimension_semantics=("parallel",),      # megacore sharding on v7x
            vmem_limit_bytes=32 * 1024 * 1024,      # safe headroom on all gens
        ),
        cost_estimate=cost,
    )(w, b, x2d)

    out = out2d.reshape(-1)
    if needs_slice:
        out = out[:n]
    return out.reshape(orig_shape)


if __name__ == "__main__":
    key = jax.random.PRNGKey(0)
    kw, kb, kx = jax.random.split(key, 3)

    # nn.Parameter(torch.randn(1)) equivalents.
    weights = jax.random.normal(kw, (1,), dtype=jnp.float32)
    bias = jax.random.normal(kb, (1,), dtype=jnp.float32)

    test_shapes = [
        (8, 1),        # tiny            -> fast path
        (2000, 1),     # course-sized    -> fast path
        (262144, 1),   # lane=1024, 2 grid steps, no pad          -> kernel path
        (160000, 1),   # lane=256, partial boundary block, no pad -> kernel path
        (100003, 1),   # not a multiple of 128 -> padded fallback -> kernel path
    ]
    keys = jax.random.split(kx, len(test_shapes))
    for k, shape in zip(keys, test_shapes):
        x = jax.random.normal(k, shape, dtype=jnp.float32)
        y = jax.block_until_ready(linear_regression(x, weights, bias))
        y_ref = weights * x + bias
        assert y.shape == x.shape and y.dtype == x.dtype, shape
        assert jnp.allclose(y, y_ref, atol=1e-6, rtol=1e-6), shape

    # TODO(synk): nn.MSELoss is only stored as an attribute in the module and
    # never used in forward(), so it is intentionally not implemented here.
    print("KERNEL_OK")
</pallas_src>

<mosaic_0001>
module attributes {stable_mosaic.version = 11 : i64} {
  func.func @_linreg_kernel(%arg0: i32, %arg1: memref<1xf32, #tpu.memory_space<smem>>, %arg2: memref<1xf32, #tpu.memory_space<smem>>, %arg3: memref<128x1024xf32, #tpu.memory_space<vmem>>, %arg4: memref<128x1024xf32, #tpu.memory_space<vmem>>) attributes {dimension_semantics = [#tpu.dimension_semantics<parallel>], iteration_bounds = array<i64: 2>, scalar_prefetch = 0 : i64, scratch_operands = 0 : i64, tpu.core_type = #tpu.core_type<tc>, window_params = [{transform_indices = @transform_0, window_bounds = array<i64: 1>}, {transform_indices = @transform_1, window_bounds = array<i64: 1>}, {transform_indices = @transform_2, window_bounds = array<i64: 128, 1024>}, {transform_indices = @transform_3, window_bounds = array<i64: 128, 1024>}]} {
    %c0 = arith.constant 0 : index
    %0 = memref.load %arg1[%c0] : memref<1xf32, #tpu.memory_space<smem>>
    %c0_0 = arith.constant 0 : index
    %c0_1 = arith.constant 0 : index
    %1 = vector.load %arg3[%c0_0, %c0_1] : memref<128x1024xf32, #tpu.memory_space<vmem>>, vector<128x1024xf32>
    %2 = vector.broadcast %0 : f32 to vector<128x1024xf32>
    %3 = arith.mulf %2, %1 : vector<128x1024xf32>
    %c0_2 = arith.constant 0 : index
    %4 = memref.load %arg2[%c0_2] : memref<1xf32, #tpu.memory_space<smem>>
    %5 = vector.broadcast %4 : f32 to vector<128x1024xf32>
    %6 = arith.addf %3, %5 : vector<128x1024xf32>
    %c0_3 = arith.constant 0 : index
    %c0_4 = arith.constant 0 : index
    %7 = vector.load %arg4[%c0_3, %c0_4] : memref<128x1024xf32, #tpu.memory_space<vmem>>, vector<128x1024xf32>
    tpu.vector_store %arg4[%c0_3, %c0_4], %6 {strides = array<i32>} : memref<128x1024xf32, #tpu.memory_space<vmem>>, vector<128x1024xf32>,
    return
  }
  func.func @transform_0(%arg0: i32) -> i32 {
    %c0_i32 = arith.constant 0 : i32
    %c0_i32_0 = arith.constant 0 : i32
    return %c0_i32 : i32
  }
  func.func @transform_1(%arg0: i32) -> i32 {
    %c0_i32 = arith.constant 0 : i32
    %c0_i32_0 = arith.constant 0 : i32
    return %c0_i32 : i32
  }
  func.func @transform_2(%arg0: i32) -> (i32, i32) {
    %c0_i32 = arith.constant 0 : i32
    %c0_i32_0 = arith.constant 0 : i32
    return %arg0, %c0_i32 : i32, i32
  }
  func.func @transform_3(%arg0: i32) -> (i32, i32) {
    %c0_i32 = arith.constant 0 : i32
    %c0_i32_0 = arith.constant 0 : i32
    return %arg0, %c0_i32 : i32, i32
  }
}

</mosaic_0001>

<llo_original>
// kernel: tpu_custom_call.1
$region0: #{tpu_custom_call.1}
  #allocation0 [shape = 'u32[]', space=smem, size = 0x4, offset = 0x4, fixed_abs, tag = 'smem constant byte address 0x4 - core index']
  #allocation1 [shape = 'u32[72,128]{1,0:T(1,128)}', space=vmem, size = 0x9000, scoped, tag = 'internal scratch']
  #allocation2 [shape = 'f32[1]{0:T(128)S(6)}', space=smem, size = 0x200, scoped, tag = 'scoped memory for tpu_custom_call.1']
  #allocation3 [shape = 'f32[1]{0:T(128)S(6)}', space=smem, size = 0x200, scoped, tag = 'scoped memory for tpu_custom_call.1']
  %s0 = inlined_call_operand.<no memory space> [shape: f32[1], index: 0, kind: input, shape index: {}]
  %s1 = inlined_call_operand.<no memory space> [shape: f32[1], index: 1, kind: input, shape index: {}]
  %s2 = inlined_call_operand.hbm [shape: f32[256,1024], index: 2, kind: input, shape index: {}]
  %s3 = inlined_call_operand.hbm [shape: f32[256,1024], index: 3, kind: output, shape index: {}]
  %s4 = sld [smem:[#allocation0]]
  $region49: #{tpu_custom_call.1} parent=0
    _
  %s6 = ssub.s32 1, %s4
  %s7 = scalar_select 0, %s6, %s4
  %8 = sst [smem:[#allocation2]] %s0
  %9 = sst [smem:[#allocation3]] %s1
  $region1: #{tpu_custom_call.1} parent=0
    #allocation4 [shape = 'u8[1048576]{0}', space=vmem, size = 0x100000, scoped, tag = 'input window, operand 2']
    #allocation5 [shape = 's32[2]{0}', space=sflag, size = 0x8, scoped, tag = 'scoped memory for tpu_custom_call.1']
    #allocation6 [shape = 's32[2]{0}', space=sflag, size = 0x8, scoped, tag = 'scoped memory for tpu_custom_call.1']
    #allocation7 [shape = 'u8[1048576]{0}', space=vmem, size = 0x100000, scoped, tag = 'output window, operand 0']
    %10 = vsyncpa [#allocation5], 0
    %s11 = scalar_lea.sflag [#allocation5], 1
    %12 = vsyncpa %s11, 0
    %13 = vsyncpa [#allocation6], 0
    %s14 = scalar_lea.sflag [#allocation6], 1
    %15 = vsyncpa %s14, 0
    loop: start=0, step=1, limit=4
    $region2: #{tpu_custom_call.1} parent=1 // loop_pre_header
      _
    $region3: #{tpu_custom_call.1} parent=1 // loop_header
      %s17 = sphi 0, %s21
      %p18 = scmp.ge.s32.totalorder %s17, 4
      %s25 = sphi 0, %s25
      %s27 = sphi 0, %s25
      %s28 = sphi 0, %s27
      %s42 = sphi 0, %s28
      %s46 = sphi 0, %s46
      %s48 = sphi 0, %s46
      %s49 = sphi 0, %s48
      %s63 = sphi 0, %s49
      %s69 = sphi 0, %s71
      %s72 = sphi 0, %s69
      %s73 = sphi 0, %s72
      %s89 = sphi 0, %s73
      %s95 = sphi 0, %s97
      %s98 = sphi 0, %s95
      %s99 = sphi 0, %s98
      %s115 = sphi 0, %s99
    $region4: #{tpu_custom_call.1} parent=1 // loop_header_branch
      %20 = sbr.rel (%p18) target = $region8
    $region5: #{tpu_custom_call.1} parent=1 // loop_body
      %s22 = ssub.s32 %s17, 1
      %s23 = ssub.s32 %s17, 2
      %s24 = sadd.s32 %s17, 1
      %s26 = sadd.s32 %s25, 1
      %p29 = scmp.eq.s32.totalorder %s17, 1
      %p30 = scmp.ne.s32.totalorder %s25, %s27
      %p31 = scmp.eq.s32.totalorder %s17, 0
      %p32 = por %p30, %p31
      %p33 = scmp.ne.s32.totalorder %s25, %s27
      %p34 = scmp.eq.s32.totalorder %s22, 1
      %p35 = por %p33, %p34
      %p36 = scmp.ne.s32.totalorder %s27, %s28
      %p37 = scmp.eq.s32.totalorder %s22, 0
      %p38 = por %p36, %p37
      %p39 = scmp.ne.s32.totalorder %s27, %s28
      %p40 = scmp.eq.s32.totalorder %s23, 1
      %p41 = por %p39, %p40
      %p43 = scmp.ne.s32.totalorder %s28, %s42
      %p44 = scmp.eq.s32.totalorder %s23, 0
      %p45 = por %p43, %p44
      %s47 = sadd.s32 %s46, 1
      %p50 = scmp.eq.s32.totalorder %s17, 1
      %p51 = scmp.ne.s32.totalorder %s46, %s48
      %p52 = scmp.eq.s32.totalorder %s17, 0
      %p53 = por %p51, %p52
      %p54 = scmp.ne.s32.totalorder %s46, %s48
      %p55 = scmp.eq.s32.totalorder %s22, 1
      %p56 = por %p54, %p55
      %p57 = scmp.ne.s32.totalorder %s48, %s49
      %p58 = scmp.eq.s32.totalorder %s22, 0
      %p59 = por %p57, %p58
      %p60 = scmp.ne.s32.totalorder %s48, %s49
      %p61 = scmp.eq.s32.totalorder %s23, 1
      %p62 = por %p60, %p61
      %p64 = scmp.ne.s32.totalorder %s49, %s63
      %p65 = scmp.eq.s32.totalorder %s23, 0
      %p66 = por %p64, %p65
      %s67 = ssub.s32 %s17, %s24
      %p68 = scmp.eq.s32.totalorder %s67, 0
      %s70 = sadd.s32 %s69, 1
      %s71 = scalar_select %p68, %s69, %s70
      %p74 = pneg %p68
      %p75 = scmp.eq.s32.totalorder %s17, 1
      %p76 = por %p74, %p75
      %p77 = scmp.ne.s32.totalorder %s69, %s72
      %p78 = scmp.eq.s32.totalorder %s17, 0
      %p79 = por %p77, %p78
      %p80 = scmp.ne.s32.totalorder %s69, %s72
      %p81 = scmp.eq.s32.totalorder %s22, 1
      %p82 = por %p80, %p81
      %p83 = scmp.ne.s32.totalorder %s72, %s73
      %p84 = scmp.eq.s32.totalorder %s22, 0
      %p85 = por %p83, %p84
      %p86 = scmp.ne.s32.totalorder %s72, %s73
      %p87 = scmp.eq.s32.totalorder %s23, 1
      %p88 = por %p86, %p87
      %p90 = scmp.ne.s32.totalorder %s73, %s89
      %p91 = scmp.eq.s32.totalorder %s23, 0
      %p92 = por %p90, %p91
      %s93 = ssub.s32 %s17, %s24
      %p94 = scmp.eq.s32.totalorder %s93, 0
      %s96 = sadd.s32 %s95, 1
      %s97 = scalar_select %p94, %s95, %s96
      %p100 = pneg %p94
      %p101 = scmp.eq.s32.totalorder %s17, 1
      %p102 = por %p100, %p101
      %p103 = scmp.ne.s32.totalorder %s95, %s98
      %p104 = scmp.eq.s32.totalorder %s17, 0
      %p105 = por %p103, %p104
      %p106 = scmp.ne.s32.totalorder %s95, %s98
      %p107 = scmp.eq.s32.totalorder %s22, 1
      %p108 = por %p106, %p107
      %p109 = scmp.ne.s32.totalorder %s98, %s99
      %p110 = scmp.eq.s32.totalorder %s22, 0
      %p111 = por %p109, %p110
      %p112 = scmp.ne.s32.totalorder %s98, %s99
      %p113 = scmp.eq.s32.totalorder %s23, 1
      %p114 = por %p112, %p113
      %p116 = scmp.ne.s32.totalorder %s99, %s115
      %p117 = scmp.eq.s32.totalorder %s23, 0
      %p118 = por %p116, %p117
      %p119 = scmp.le.s32.totalorder 1, %s17
      %p120 = scmp.lt.s32.totalorder %s17, 3
      %p121 = pnand %p119, %p120
      %p122 = pneg %p121
      // Predicated region
      $region9: #{tpu_custom_call.1} parent=5 // pred_check
        _
      $region10: #{tpu_custom_call.1} parent=5 // pred_check_branch
        %124 = sbr.rel (%p121) target = $region12
      $region11: #{tpu_custom_call.1} parent=5 // pred_region
        %s125 = ssub.s32 %s17, 1
        // Predicated region
        $region13: #{tpu_custom_call.1} parent=11 // pred_check
          %p126 = pneg %p38
        $region14: #{tpu_custom_call.1} parent=11 // pred_check_branch
          %128 = sbr.rel (%p126) target = $region16
        $region15: #{tpu_custom_call.1} parent=11 // pred_region
          _
        $region16: #{tpu_custom_call.1} parent=11 // pred_fallthru
          _
        // Predicated region
        $region17: #{tpu_custom_call.1} parent=11 // pred_check
          %p129 = pneg %p59
        $region18: #{tpu_custom_call.1} parent=11 // pred_check_branch
          %131 = sbr.rel (%p129) target = $region20
        $region19: #{tpu_custom_call.1} parent=11 // pred_region
          _
        $region20: #{tpu_custom_call.1} parent=11 // pred_fallthru
          _
      $region12: #{tpu_custom_call.1} parent=5 // pred_fallthru
        _
      %p132 = scmp.lt.s32.totalorder %s17, 2
      // Predicated region
      $region21: #{tpu_custom_call.1} parent=5 // pred_check
        %p133 = pneg %p132
      $region22: #{tpu_custom_call.1} parent=5 // pred_check_branch
        %135 = sbr.rel (%p133) target = $region24
      $region23: #{tpu_custom_call.1} parent=5 // pred_region
        // Predicated region
        $region25: #{tpu_custom_call.1} parent=23 // pred_check
          %p136 = pneg %p79
        $region26: #{tpu_custom_call.1} parent=23 // pred_check_branch
          %138 = sbr.rel (%p136) target = $region28
        $region27: #{tpu_custom_call.1} parent=23 // pred_region
          %s139 = sand.u32 %s69, 1
          %s140 = scalar_lea.sflag [#allocation5], %s139
          %s141 = sand.u32 %s69, 1
          %s142 = smul.addr %s141, 1024
          %s143 = scalar_lea.vmem [#allocation4], %s142
          %s144 = smul.u32 16, %s17
          %146 = vsyncadd %s140, 0
          %s147 = smul.addr %s144, 8
          %s148 = smul.addr %s147, 8
          %s149 = scalar_lea.hbm %s2, %s148
          %s150 = sshll.u32 %s149, 4
          %s151 = int_to_ptr.hbm [resolvable:$true] %s150
          %s152 = sshll.u32 %s143, 4
          %s153 = int_to_ptr.vmem [resolvable:$true] %s152
          %158 = dma.hbm_to_vmem [thread:$0]  %s151, 16384, %s153, %s140, 1024, 1024, 64
        $region28: #{tpu_custom_call.1} parent=23 // pred_fallthru
          _
      $region24: #{tpu_custom_call.1} parent=5 // pred_fallthru
        _
      %p159 = scmp.le.s32.totalorder 1, %s17
      %p160 = scmp.lt.s32.totalorder %s17, 3
      %p161 = pnand %p159, %p160
      %p162 = pneg %p161
      // Predicated region
      $region29: #{tpu_custom_call.1} parent=5 // pred_check
        _
      $region30: #{tpu_custom_call.1} parent=5 // pred_check_branch
        %164 = sbr.rel (%p161) target = $region32
      $region31: #{tpu_custom_call.1} parent=5 // pred_region
        %s165 = ssub.s32 %s17, 1
        %s166 = sand.u32 %s72, 1
        %s167 = scalar_lea.sflag [#allocation5], %s166
        %s168 = sand.u32 %s72, 1
        %s169 = smul.addr %s168, 1024
        %s170 = scalar_lea.vmem [#allocation4], %s169
        // Predicated region
        $region33: #{tpu_custom_call.1} parent=31 // pred_check
          %p171 = pneg %p85
        $region34: #{tpu_custom_call.1} parent=31 // pred_check_branch
          %173 = sbr.rel (%p171) target = $region36
        $region35: #{tpu_custom_call.1} parent=31 // pred_region
          %175 = dma.done %s167, 16384
        $region36: #{tpu_custom_call.1} parent=31 // pred_fallthru
          _
        %p176 = pneg %p38
        %p177 = pneg %p35
        %p178 = pneg %p59
        %p179 = pneg %p56
        %s180 = sand.u32 %s72, 1
        %s181 = scalar_lea.sflag [#allocation5], %s180
        %s182 = sand.u32 %s72, 1
        %s183 = smul.addr %s182, 1024
        %s184 = scalar_lea.vmem [#allocation4], %s183
        %p185 = pneg %p85
        %p186 = pneg %p82
        %p187 = pneg %p111
        %p188 = pneg %p108
        %s189 = sand.u32 %s98, 1
        %s190 = scalar_lea.sflag [#allocation6], %s189
        %s191 = sand.u32 %s98, 1
        %s192 = smul.addr %s191, 1024
        %s193 = scalar_lea.vmem [#allocation7], %s192
        %s194 = smul.u32 16, %s22
        %s195 = smul.u32 16, %s22
        %s196 = sld [smem:[#allocation2]]
        %v197 = vld [vmem:[%s170] sm:$0xff]
        %v198 = vld [vmem:[%s170 + $0x8] sm:$0xff]
        %v199 = vld [vmem:[%s170 + $0x10] sm:$0xff]
        %v200 = vld [vmem:[%s170 + $0x18] sm:$0xff]
        %v201 = vld [vmem:[%s170 + $0x20] sm:$0xff]
        %v202 = vld [vmem:[%s170 + $0x28] sm:$0xff]
        %v203 = vld [vmem:[%s170 + $0x30] sm:$0xff]
        %v204 = vld [vmem:[%s170 + $0x38] sm:$0xff]
        %v205 = vld [vmem:[%s170 + $0x40] sm:$0xff]
        %v206 = vld [vmem:[%s170 + $0x48] sm:$0xff]
        %v207 = vld [vmem:[%s170 + $0x50] sm:$0xff]
        %v208 = vld [vmem:[%s170 + $0x58] sm:$0xff]
        %v209 = vld [vmem:[%s170 + $0x60] sm:$0xff]
        %v210 = vld [vmem:[%s170 + $0x68] sm:$0xff]
        %v211 = vld [vmem:[%s170 + $0x70] sm:$0xff]
        %v212 = vld [vmem:[%s170 + $0x78] sm:$0xff]
        %v213 = vld [vmem:[%s170 + $0x80] sm:$0xff]
        %v214 = vld [vmem:[%s170 + $0x88] sm:$0xff]
        %v215 = vld [vmem:[%s170 + $0x90] sm:$0xff]
        %v216 = vld [vmem:[%s170 + $0x98] sm:$0xff]
        %v217 = vld [vmem:[%s170 + $0xa0] sm:$0xff]
        %v218 = vld [vmem:[%s170 + $0xa8] sm:$0xff]
        %v219 = vld [vmem:[%s170 + $0xb0] sm:$0xff]
        %v220 = vld [vmem:[%s170 + $0xb8] sm:$0xff]
        %v221 = vld [vmem:[%s170 + $0xc0] sm:$0xff]
        %v222 = vld [vmem:[%s170 + $0xc8] sm:$0xff]
        %v223 = vld [vmem:[%s170 + $0xd0] sm:$0xff]
        %v224 = vld [vmem:[%s170 + $0xd8] sm:$0xff]
        %v225 = vld [vmem:[%s170 + $0xe0] sm:$0xff]
        %v226 = vld [vmem:[%s170 + $0xe8] sm:$0xff]
        %v227 = vld [vmem:[%s170 + $0xf0] sm:$0xff]
        %v228 = vld [vmem:[%s170 + $0xf8] sm:$0xff]
        %v229 = vld [vmem:[%s170 + $0x100] sm:$0xff]
        %v230 = vld [vmem:[%s170 + $0x108] sm:$0xff]
        %v231 = vld [vmem:[%s170 + $0x110] sm:$0xff]
        %v232 = vld [vmem:[%s170 + $0x118] sm:$0xff]
        %v233 = vld [vmem:[%s170 + $0x120] sm:$0xff]
        %v234 = vld [vmem:[%s170 + $0x128] sm:$0xff]
        %v235 = vld [vmem:[%s170 + $0x130] sm:$0xff]
        %v236 = vld [vmem:[%s170 + $0x138] sm:$0xff]
        %v237 = vld [vmem:[%s170 + $0x140] sm:$0xff]
        %v238 = vld [vmem:[%s170 + $0x148] sm:$0xff]
        %v239 = vld [vmem:[%s170 + $0x150] sm:$0xff]
        %v240 = vld [vmem:[%s170 + $0x158] sm:$0xff]
        %v241 = vld [vmem:[%s170 + $0x160] sm:$0xff]
        %v242 = vld [vmem:[%s170 + $0x168] sm:$0xff]
        %v243 = vld [vmem:[%s170 + $0x170] sm:$0xff]
        %v244 = vld [vmem:[%s170 + $0x178] sm:$0xff]
        %v245 = vld [vmem:[%s170 + $0x180] sm:$0xff]
        %v246 = vld [vmem:[%s170 + $0x188] sm:$0xff]
        %v247 = vld [vmem:[%s170 + $0x190] sm:$0xff]
        %v248 = vld [vmem:[%s170 + $0x198] sm:$0xff]
        %v249 = vld [vmem:[%s170 + $0x1a0] sm:$0xff]
        %v250 = vld [vmem:[%s170 + $0x1a8] sm:$0xff]
        %v251 = vld [vmem:[%s170 + $0x1b0] sm:$0xff]
        %v252 = vld [vmem:[%s170 + $0x1b8] sm:$0xff]
        %v253 = vld [vmem:[%s170 + $0x1c0] sm:$0xff]
        %v254 = vld [vmem:[%s170 + $0x1c8] sm:$0xff]
        %v255 = vld [vmem:[%s170 + $0x1d0] sm:$0xff]
        %v256 = vld [vmem:[%s170 + $0x1d8] sm:$0xff]
        %v257 = vld [vmem:[%s170 + $0x1e0] sm:$0xff]
        %v258 = vld [vmem:[%s170 + $0x1e8] sm:$0xff]
        %v259 = vld [vmem:[%s170 + $0x1f0] sm:$0xff]
        %v260 = vld [vmem:[%s170 + $0x1f8] sm:$0xff]
        %v261 = vld [vmem:[%s170 + $0x200] sm:$0xff]
        %v262 = vld [vmem:[%s170 + $0x208] sm:$0xff]
        %v263 = vld [vmem:[%s170 + $0x210] sm:$0xff]
        %v264 = vld [vmem:[%s170 + $0x218] sm:$0xff]
        %v265 = vld [vmem:[%s170 + $0x220] sm:$0xff]
        %v266 = vld [vmem:[%s170 + $0x228] sm:$0xff]
        %v267 = vld [vmem:[%s170 + $0x230] sm:$0xff]
        %v268 = vld [vmem:[%s170 + $0x238] sm:$0xff]
        %v269 = vld [vmem:[%s170 + $0x240] sm:$0xff]
        %v270 = vld [vmem:[%s170 + $0x248] sm:$0xff]
        %v271 = vld [vmem:[%s170 + $0x250] sm:$0xff]
        %v272 = vld [vmem:[%s170 + $0x258] sm:$0xff]
        %v273 = vld [vmem:[%s170 + $0x260] sm:$0xff]
        %v274 = vld [vmem:[%s170 + $0x268] sm:$0xff]
        %v275 = vld [vmem:[%s170 + $0x270] sm:$0xff]
        %v276 = vld [vmem:[%s170 + $0x278] sm:$0xff]
        %v277 = vld [vmem:[%s170 + $0x280] sm:$0xff]
        %v278 = vld [vmem:[%s170 + $0x288] sm:$0xff]
        %v279 = vld [vmem:[%s170 + $0x290] sm:$0xff]
        %v280 = vld [vmem:[%s170 + $0x298] sm:$0xff]
        %v281 = vld [vmem:[%s170 + $0x2a0] sm:$0xff]
        %v282 = vld [vmem:[%s170 + $0x2a8] sm:$0xff]
        %v283 = vld [vmem:[%s170 + $0x2b0] sm:$0xff]
        %v284 = vld [vmem:[%s170 + $0x2b8] sm:$0xff]
        %v285 = vld [vmem:[%s170 + $0x2c0] sm:$0xff]
        %v286 = vld [vmem:[%s170 + $0x2c8] sm:$0xff]
        %v287 = vld [vmem:[%s170 + $0x2d0] sm:$0xff]
        %v288 = vld [vmem:[%s170 + $0x2d8] sm:$0xff]
        %v289 = vld [vmem:[%s170 + $0x2e0] sm:$0xff]
        %v290 = vld [vmem:[%s170 + $0x2e8] sm:$0xff]
        %v291 = vld [vmem:[%s170 + $0x2f0] sm:$0xff]
        %v292 = vld [vmem:[%s170 + $0x2f8] sm:$0xff]
        %v293 = vld [vmem:[%s170 + $0x300] sm:$0xff]
        %v294 = vld [vmem:[%s170 + $0x308] sm:$0xff]
        %v295 = vld [vmem:[%s170 + $0x310] sm:$0xff]
        %v296 = vld [vmem:[%s170 + $0x318] sm:$0xff]
        %v297 = vld [vmem:[%s170 + $0x320] sm:$0xff]
        %v298 = vld [vmem:[%s170 + $0x328] sm:$0xff]
        %v299 = vld [vmem:[%s170 + $0x330] sm:$0xff]
        %v300 = vld [vmem:[%s170 + $0x338] sm:$0xff]
        %v301 = vld [vmem:[%s170 + $0x340] sm:$0xff]
        %v302 = vld [vmem:[%s170 + $0x348] sm:$0xff]
        %v303 = vld [vmem:[%s170 + $0x350] sm:$0xff]
        %v304 = vld [vmem:[%s170 + $0x358] sm:$0xff]
        %v305 = vld [vmem:[%s170 + $0x360] sm:$0xff]
        %v306 = vld [vmem:[%s170 + $0x368] sm:$0xff]
        %v307 = vld [vmem:[%s170 + $0x370] sm:$0xff]
        %v308 = vld [vmem:[%s170 + $0x378] sm:$0xff]
        %v309 = vld [vmem:[%s170 + $0x380] sm:$0xff]
        %v310 = vld [vmem:[%s170 + $0x388] sm:$0xff]
        %v311 = vld [vmem:[%s170 + $0x390] sm:$0xff]
        %v312 = vld [vmem:[%s170 + $0x398] sm:$0xff]
        %v313 = vld [vmem:[%s170 + $0x3a0] sm:$0xff]
        %v314 = vld [vmem:[%s170 + $0x3a8] sm:$0xff]
        %v315 = vld [vmem:[%s170 + $0x3b0] sm:$0xff]
        %v316 = vld [vmem:[%s170 + $0x3b8] sm:$0xff]
        %v317 = vld [vmem:[%s170 + $0x3c0] sm:$0xff]
        %v318 = vld [vmem:[%s170 + $0x3c8] sm:$0xff]
        %v319 = vld [vmem:[%s170 + $0x3d0] sm:$0xff]
        %v320 = vld [vmem:[%s170 + $0x3d8] sm:$0xff]
        %v321 = vld [vmem:[%s170 + $0x3e0] sm:$0xff]
        %v322 = vld [vmem:[%s170 + $0x3e8] sm:$0xff]
        %v323 = vld [vmem:[%s170 + $0x3f0] sm:$0xff]
        %v324 = vld [vmem:[%s170 + $0x3f8] sm:$0xff]
        %v325 = vstv %s196
        %v326 = vmul.f32 %v325, %v197
        %v327 = vmul.f32 %v325, %v198
        %v328 = vmul.f32 %v325, %v199
        %v329 = vmul.f32 %v325, %v200
        %v330 = vmul.f32 %v325, %v201
        %v331 = vmul.f32 %v325, %v202
        %v332 = vmul.f32 %v325, %v203
        %v333 = vmul.f32 %v325, %v204
        %v334 = vmul.f32 %v325, %v205
        %v335 = vmul.f32 %v325, %v206
        %v336 = vmul.f32 %v325, %v207
        %v337 = vmul.f32 %v325, %v208
        %v338 = vmul.f32 %v325, %v209
        %v339 = vmul.f32 %v325, %v210
        %v340 = vmul.f32 %v325, %v211
        %v341 = vmul.f32 %v325, %v212
        %v342 = vmul.f32 %v325, %v213
        %v343 = vmul.f32 %v325, %v214
        %v344 = vmul.f32 %v325, %v215
        %v345 = vmul.f32 %v325, %v216
        %v346 = vmul.f32 %v325, %v217
        %v347 = vmul.f32 %v325, %v218
        %v348 = vmul.f32 %v325, %v219
        %v349 = vmul.f32 %v325, %v220
        %v350 = vmul.f32 %v325, %v221
        %v351 = vmul.f32 %v325, %v222
        %v352 = vmul.f32 %v325, %v223
        %v353 = vmul.f32 %v325, %v224
        %v354 = vmul.f32 %v325, %v225
        %v355 = vmul.f32 %v325, %v226
        %v356 = vmul.f32 %v325, %v227
        %v357 = vmul.f32 %v325, %v228
        %v358 = vmul.f32 %v325, %v229
        %v359 = vmul.f32 %v325, %v230
        %v360 = vmul.f32 %v325, %v231
        %v361 = vmul.f32 %v325, %v232
        %v362 = vmul.f32 %v325, %v233
        %v363 = vmul.f32 %v325, %v234
        %v364 = vmul.f32 %v325, %v235
        %v365 = vmul.f32 %v325, %v236
        %v366 = vmul.f32 %v325, %v237
        %v367 = vmul.f32 %v325, %v238
        %v368 = vmul.f32 %v325, %v239
        %v369 = vmul.f32 %v325, %v240
        %v370 = vmul.f32 %v325, %v241
        %v371 = vmul.f32 %v325, %v242
        %v372 = vmul.f32 %v325, %v243
        %v373 = vmul.f32 %v325, %v244
        %v374 = vmul.f32 %v325, %v245
        %v375 = vmul.f32 %v325, %v246
        %v376 = vmul.f32 %v325, %v247
        %v377 = vmul.f32 %v325, %v248
        %v378 = vmul.f32 %v325, %v249
        %v379 = vmul.f32 %v325, %v250
        %v380 = vmul.f32 %v325, %v251
        %v381 = vmul.f32 %v325, %v252
        %v382 = vmul.f32 %v325, %v253
        %v383 = vmul.f32 %v325, %v254
        %v384 = vmul.f32 %v325, %v255
        %v385 = vmul.f32 %v325, %v256
        %v386 = vmul.f32 %v325, %v257
        %v387 = vmul.f32 %v325, %v258
        %v388 = vmul.f32 %v325, %v259
        %v389 = vmul.f32 %v325, %v260
        %v390 = vmul.f32 %v325, %v261
        %v391 = vmul.f32 %v325, %v262
        %v392 = vmul.f32 %v325, %v263
        %v393 = vmul.f32 %v325, %v264
        %v394 = vmul.f32 %v325, %v265
        %v395 = vmul.f32 %v325, %v266
        %v396 = vmul.f32 %v325, %v267
        %v397 = vmul.f32 %v325, %v268
        %v398 = vmul.f32 %v325, %v269
        %v399 = vmul.f32 %v325, %v270
        %v400 = vmul.f32 %v325, %v271
        %v401 = vmul.f32 %v325, %v272
        %v402 = vmul.f32 %v325, %v273
        %v403 = vmul.f32 %v325, %v274
        %v404 = vmul.f32 %v325, %v275
        %v405 = vmul.f32 %v325, %v276
        %v406 = vmul.f32 %v325, %v277
        %v407 = vmul.f32 %v325, %v278
        %v408 = vmul.f32 %v325, %v279
        %v409 = vmul.f32 %v325, %v280
        %v410 = vmul.f32 %v325, %v281
        %v411 = vmul.f32 %v325, %v282
        %v412 = vmul.f32 %v325, %v283
        %v413 = vmul.f32 %v325, %v284
        %v414 = vmul.f32 %v325, %v285
        %v415 = vmul.f32 %v325, %v286
        %v416 = vmul.f32 %v325, %v287
        %v417 = vmul.f32 %v325, %v288
        %v418 = vmul.f32 %v325, %v289
        %v419 = vmul.f32 %v325, %v290
        %v420 = vmul.f32 %v325, %v291
        %v421 = vmul.f32 %v325, %v292
        %v422 = vmul.f32 %v325, %v293
        %v423 = vmul.f32 %v325, %v294
        %v424 = vmul.f32 %v325, %v295
        %v425 = vmul.f32 %v325, %v296
        %v426 = vmul.f32 %v325, %v297
        %v427 = vmul.f32 %v325, %v298
        %v428 = vmul.f32 %v325, %v299
        %v429 = vmul.f32 %v325, %v300
        %v430 = vmul.f32 %v325, %v301
        %v431 = vmul.f32 %v325, %v302
        %v432 = vmul.f32 %v325, %v303
        %v433 = vmul.f32 %v325, %v304
        %v434 = vmul.f32 %v325, %v305
        %v435 = vmul.f32 %v325, %v306
        %v436 = vmul.f32 %v325, %v307
        %v437 = vmul.f32 %v325, %v308
        %v438 = vmul.f32 %v325, %v309
        %v439 = vmul.f32 %v325, %v310
        %v440 = vmul.f32 %v325, %v311
        %v441 = vmul.f32 %v325, %v312
        %v442 = vmul.f32 %v325, %v313
        %v443 = vmul.f32 %v325, %v314
        %v444 = vmul.f32 %v325, %v315
        %v445 = vmul.f32 %v325, %v316
        %v446 = vmul.f32 %v325, %v317
        %v447 = vmul.f32 %v325, %v318
        %v448 = vmul.f32 %v325, %v319
        %v449 = vmul.f32 %v325, %v320
        %v450 = vmul.f32 %v325, %v321
        %v451 = vmul.f32 %v325, %v322
        %v452 = vmul.f32 %v325, %v323
        %v453 = vmul.f32 %v325, %v324
        %s454 = sld [smem:[#allocation3]]
        %v455 = vstv %s454
        %v456 = vadd.f32 %v326, %v455
        %v457 = vadd.f32 %v327, %v455
        %v458 = vadd.f32 %v328, %v455
        %v459 = vadd.f32 %v329, %v455
        %v460 = vadd.f32 %v330, %v455
        %v461 = vadd.f32 %v331, %v455
        %v462 = vadd.f32 %v332, %v455
        %v463 = vadd.f32 %v333, %v455
        %v464 = vadd.f32 %v334, %v455
        %v465 = vadd.f32 %v335, %v455
        %v466 = vadd.f32 %v336, %v455
        %v467 = vadd.f32 %v337, %v455
        %v468 = vadd.f32 %v338, %v455
        %v469 = vadd.f32 %v339, %v455
        %v470 = vadd.f32 %v340, %v455
        %v471 = vadd.f32 %v341, %v455
        %v472 = vadd.f32 %v342, %v455
        %v473 = vadd.f32 %v343, %v455
        %v474 = vadd.f32 %v344, %v455
        %v475 = vadd.f32 %v345, %v455
        %v476 = vadd.f32 %v346, %v455
        %v477 = vadd.f32 %v347, %v455
        %v478 = vadd.f32 %v348, %v455
        %v479 = vadd.f32 %v349, %v455
        %v480 = vadd.f32 %v350, %v455
        %v481 = vadd.f32 %v351, %v455
        %v482 = vadd.f32 %v352, %v455
        %v483 = vadd.f32 %v353, %v455
        %v484 = vadd.f32 %v354, %v455
        %v485 = vadd.f32 %v355, %v455
        %v486 = vadd.f32 %v356, %v455
        %v487 = vadd.f32 %v357, %v455
        %v488 = vadd.f32 %v358, %v455
        %v489 = vadd.f32 %v359, %v455
        %v490 = vadd.f32 %v360, %v455
        %v491 = vadd.f32 %v361, %v455
        %v492 = vadd.f32 %v362, %v455
        %v493 = vadd.f32 %v363, %v455
        %v494 = vadd.f32 %v364, %v455
        %v495 = vadd.f32 %v365, %v455
        %v496 = vadd.f32 %v366, %v455
        %v497 = vadd.f32 %v367, %v455
        %v498 = vadd.f32 %v368, %v455
        %v499 = vadd.f32 %v369, %v455
        %v500 = vadd.f32 %v370, %v455
        %v501 = vadd.f32 %v371, %v455
        %v502 = vadd.f32 %v372, %v455
        %v503 = vadd.f32 %v373, %v455
        %v504 = vadd.f32 %v374, %v455
        %v505 = vadd.f32 %v375, %v455
        %v506 = vadd.f32 %v376, %v455
        %v507 = vadd.f32 %v377, %v455
        %v508 = vadd.f32 %v378, %v455
        %v509 = vadd.f32 %v379, %v455
        %v510 = vadd.f32 %v380, %v455
        %v511 = vadd.f32 %v381, %v455
        %v512 = vadd.f32 %v382, %v455
        %v513 = vadd.f32 %v383, %v455
        %v514 = vadd.f32 %v384, %v455
        %v515 = vadd.f32 %v385, %v455
        %v516 = vadd.f32 %v386, %v455
        %v517 = vadd.f32 %v387, %v455
        %v518 = vadd.f32 %v388, %v455
        %v519 = vadd.f32 %v389, %v455
        %v520 = vadd.f32 %v390, %v455
        %v521 = vadd.f32 %v391, %v455
        %v522 = vadd.f32 %v392, %v455
        %v523 = vadd.f32 %v393, %v455
        %v524 = vadd.f32 %v394, %v455
        %v525 = vadd.f32 %v395, %v455
        %v526 = vadd.f32 %v396, %v455
        %v527 = vadd.f32 %v397, %v455
        %v528 = vadd.f32 %v398, %v455
        %v529 = vadd.f32 %v399, %v455
        %v530 = vadd.f32 %v400, %v455
        %v531 = vadd.f32 %v401, %v455
        %v532 = vadd.f32 %v402, %v455
        %v533 = vadd.f32 %v403, %v455
        %v534 = vadd.f32 %v404, %v455
        %v535 = vadd.f32 %v405, %v455
        %v536 = vadd.f32 %v406, %v455
        %v537 = vadd.f32 %v407, %v455
        %v538 = vadd.f32 %v408, %v455
        %v539 = vadd.f32 %v409, %v455
        %v540 = vadd.f32 %v410, %v455
        %v541 = vadd.f32 %v411, %v455
        %v542 = vadd.f32 %v412, %v455
        %v543 = vadd.f32 %v413, %v455
        %v544 = vadd.f32 %v414, %v455
        %v545 = vadd.f32 %v415, %v455
        %v546 = vadd.f32 %v416, %v455
        %v547 = vadd.f32 %v417, %v455
        %v548 = vadd.f32 %v418, %v455
        %v549 = vadd.f32 %v419, %v455
        %v550 = vadd.f32 %v420, %v455
        %v551 = vadd.f32 %v421, %v455
        %v552 = vadd.f32 %v422, %v455
        %v553 = vadd.f32 %v423, %v455
        %v554 = vadd.f32 %v424, %v455
        %v555 = vadd.f32 %v425, %v455
        %v556 = vadd.f32 %v426, %v455
        %v557 = vadd.f32 %v427, %v455
        %v558 = vadd.f32 %v428, %v455
        %v559 = vadd.f32 %v429, %v455
        %v560 = vadd.f32 %v430, %v455
        %v561 = vadd.f32 %v431, %v455
        %v562 = vadd.f32 %v432, %v455
        %v563 = vadd.f32 %v433, %v455
        %v564 = vadd.f32 %v434, %v455
        %v565 = vadd.f32 %v435, %v455
        %v566 = vadd.f32 %v436, %v455
        %v567 = vadd.f32 %v437, %v455
        %v568 = vadd.f32 %v438, %v455
        %v569 = vadd.f32 %v439, %v455
        %v570 = vadd.f32 %v440, %v455
        %v571 = vadd.f32 %v441, %v455
        %v572 = vadd.f32 %v442, %v455
        %v573 = vadd.f32 %v443, %v455
        %v574 = vadd.f32 %v444, %v455
        %v575 = vadd.f32 %v445, %v455
        %v576 = vadd.f32 %v446, %v455
        %v577 = vadd.f32 %v447, %v455
        %v578 = vadd.f32 %v448, %v455
        %v579 = vadd.f32 %v449, %v455
        %v580 = vadd.f32 %v450, %v455
        %v581 = vadd.f32 %v451, %v455
        %v582 = vadd.f32 %v452, %v455
        %v583 = vadd.f32 %v453, %v455
        %584 = vst [vmem:[%s193] sm:$0xff] %v456
        %585 = vst [vmem:[%s193 + $0x8] sm:$0xff] %v457
        %586 = vst [vmem:[%s193 + $0x10] sm:$0xff] %v458
        %587 = vst [vmem:[%s193 + $0x18] sm:$0xff] %v459
        %588 = vst [vmem:[%s193 + $0x20] sm:$0xff] %v460
        %589 = vst [vmem:[%s193 + $0x28] sm:$0xff] %v461
        %590 = vst [vmem:[%s193 + $0x30] sm:$0xff] %v462
        %591 = vst [vmem:[%s193 + $0x38] sm:$0xff] %v463
        %592 = vst [vmem:[%s193 + $0x40] sm:$0xff] %v464
        %593 = vst [vmem:[%s193 + $0x48] sm:$0xff] %v465
        %594 = vst [vmem:[%s193 + $0x50] sm:$0xff] %v466
        %595 = vst [vmem:[%s193 + $0x58] sm:$0xff] %v467
        %596 = vst [vmem:[%s193 + $0x60] sm:$0xff] %v468
        %597 = vst [vmem:[%s193 + $0x68] sm:$0xff] %v469
        %598 = vst [vmem:[%s193 + $0x70] sm:$0xff] %v470
        %599 = vst [vmem:[%s193 + $0x78] sm:$0xff] %v471
        %600 = vst [vmem:[%s193 + $0x80] sm:$0xff] %v472
        %601 = vst [vmem:[%s193 + $0x88] sm:$0xff] %v473
        %602 = vst [vmem:[%s193 + $0x90] sm:$0xff] %v474
        %603 = vst [vmem:[%s193 + $0x98] sm:$0xff] %v475
        %604 = vst [vmem:[%s193 + $0xa0] sm:$0xff] %v476
        %605 = vst [vmem:[%s193 + $0xa8] sm:$0xff] %v477
        %606 = vst [vmem:[%s193 + $0xb0] sm:$0xff] %v478
        %607 = vst [vmem:[%s193 + $0xb8] sm:$0xff] %v479
        %608 = vst [vmem:[%s193 + $0xc0] sm:$0xff] %v480
        %609 = vst [vmem:[%s193 + $0xc8] sm:$0xff] %v481
        %610 = vst [vmem:[%s193 + $0xd0] sm:$0xff] %v482
        %611 = vst [vmem:[%s193 + $0xd8] sm:$0xff] %v483
        %612 = vst [vmem:[%s193 + $0xe0] sm:$0xff] %v484
        %613 = vst [vmem:[%s193 + $0xe8] sm:$0xff] %v485
        %614 = vst [vmem:[%s193 + $0xf0] sm:$0xff] %v486
        %615 = vst [vmem:[%s193 + $0xf8] sm:$0xff] %v487
        %616 = vst [vmem:[%s193 + $0x100] sm:$0xff] %v488
        %617 = vst [vmem:[%s193 + $0x108] sm:$0xff] %v489
        %618 = vst [vmem:[%s193 + $0x110] sm:$0xff] %v490
        %619 = vst [vmem:[%s193 + $0x118] sm:$0xff] %v491
        %620 = vst [vmem:[%s193 + $0x120] sm:$0xff] %v492
        %621 = vst [vmem:[%s193 + $0x128] sm:$0xff] %v493
        %622 = vst [vmem:[%s193 + $0x130] sm:$0xff] %v494
        %623 = vst [vmem:[%s193 + $0x138] sm:$0xff] %v495
        %624 = vst [vmem:[%s193 + $0x140] sm:$0xff] %v496
        %625 = vst [vmem:[%s193 + $0x148] sm:$0xff] %v497
        %626 = vst [vmem:[%s193 + $0x150] sm:$0xff] %v498
        %627 = vst [vmem:[%s193 + $0x158] sm:$0xff] %v499
        %628 = vst [vmem:[%s193 + $0x160] sm:$0xff] %v500
        %629 = vst [vmem:[%s193 + $0x168] sm:$0xff] %v501
        %630 = vst [vmem:[%s193 + $0x170] sm:$0xff] %v502
        %631 = vst [vmem:[%s193 + $0x178] sm:$0xff] %v503
        %632 = vst [vmem:[%s193 + $0x180] sm:$0xff] %v504
        %633 = vst [vmem:[%s193 + $0x188] sm:$0xff] %v505
        %634 = vst [vmem:[%s193 + $0x190] sm:$0xff] %v506
        %635 = vst [vmem:[%s193 + $0x198] sm:$0xff] %v507
        %636 = vst [vmem:[%s193 + $0x1a0] sm:$0xff] %v508
        %637 = vst [vmem:[%s193 + $0x1a8] sm:$0xff] %v509
        %638 = vst [vmem:[%s193 + $0x1b0] sm:$0xff] %v510
        %639 = vst [vmem:[%s193 + $0x1b8] sm:$0xff] %v511
        %640 = vst [vmem:[%s193 + $0x1c0] sm:$0xff] %v512
        %641 = vst [vmem:[%s193 + $0x1c8] sm:$0xff] %v513
        %642 = vst [vmem:[%s193 + $0x1d0] sm:$0xff] %v514
        %643 = vst [vmem:[%s193 + $0x1d8] sm:$0xff] %v515
        %644 = vst [vmem:[%s193 + $0x1e0] sm:$0xff] %v516
        %645 = vst [vmem:[%s193 + $0x1e8] sm:$0xff] %v517
        %646 = vst [vmem:[%s193 + $0x1f0] sm:$0xff] %v518
        %647 = vst [vmem:[%s193 + $0x1f8] sm:$0xff] %v519
        %648 = vst [vmem:[%s193 + $0x200] sm:$0xff] %v520
        %649 = vst [vmem:[%s193 + $0x208] sm:$0xff] %v521
        %650 = vst [vmem:[%s193 + $0x210] sm:$0xff] %v522
        %651 = vst [vmem:[%s193 + $0x218] sm:$0xff] %v523
        %652 = vst [vmem:[%s193 + $0x220] sm:$0xff] %v524
        %653 = vst [vmem:[%s193 + $0x228] sm:$0xff] %v525
        %654 = vst [vmem:[%s193 + $0x230] sm:$0xff] %v526
        %655 = vst [vmem:[%s193 + $0x238] sm:$0xff] %v527
        %656 = vst [vmem:[%s193 + $0x240] sm:$0xff] %v528
        %657 = vst [vmem:[%s193 + $0x248] sm:$0xff] %v529
        %658 = vst [vmem:[%s193 + $0x250] sm:$0xff] %v530
        %659 = vst [vmem:[%s193 + $0x258] sm:$0xff] %v531
        %660 = vst [vmem:[%s193 + $0x260] sm:$0xff] %v532
        %661 = vst [vmem:[%s193 + $0x268] sm:$0xff] %v533
        %662 = vst [vmem:[%s193 + $0x270] sm:$0xff] %v534
        %663 = vst [vmem:[%s193 + $0x278] sm:$0xff] %v535
        %664 = vst [vmem:[%s193 + $0x280] sm:$0xff] %v536
        %665 = vst [vmem:[%s193 + $0x288] sm:$0xff] %v537
        %666 = vst [vmem:[%s193 + $0x290] sm:$0xff] %v538
        %667 = vst [vmem:[%s193 + $0x298] sm:$0xff] %v539
        %668 = vst [vmem:[%s193 + $0x2a0] sm:$0xff] %v540
        %669 = vst [vmem:[%s193 + $0x2a8] sm:$0xff] %v541
        %670 = vst [vmem:[%s193 + $0x2b0] sm:$0xff] %v542
        %671 = vst [vmem:[%s193 + $0x2b8] sm:$0xff] %v543
        %672 = vst [vmem:[%s193 + $0x2c0] sm:$0xff] %v544
        %673 = vst [vmem:[%s193 + $0x2c8] sm:$0xff] %v545
        %674 = vst [vmem:[%s193 + $0x2d0] sm:$0xff] %v546
        %675 = vst [vmem:[%s193 + $0x2d8] sm:$0xff] %v547
        %676 = vst [vmem:[%s193 + $0x2e0] sm:$0xff] %v548
        %677 = vst [vmem:[%s193 + $0x2e8] sm:$0xff] %v549
        %678 = vst [vmem:[%s193 + $0x2f0] sm:$0xff] %v550
        %679 = vst [vmem:[%s193 + $0x2f8] sm:$0xff] %v551
        %680 = vst [vmem:[%s193 + $0x300] sm:$0xff] %v552
        %681 = vst [vmem:[%s193 + $0x308] sm:$0xff] %v553
        %682 = vst [vmem:[%s193 + $0x310] sm:$0xff] %v554
        %683 = vst [vmem:[%s193 + $0x318] sm:$0xff] %v555
        %684 = vst [vmem:[%s193 + $0x320] sm:$0xff] %v556
        %685 = vst [vmem:[%s193 + $0x328] sm:$0xff] %v557
        %686 = vst [vmem:[%s193 + $0x330] sm:$0xff] %v558
        %687 = vst [vmem:[%s193 + $0x338] sm:$0xff] %v559
        %688 = vst [vmem:[%s193 + $0x340] sm:$0xff] %v560
        %689 = vst [vmem:[%s193 + $0x348] sm:$0xff] %v561
        %690 = vst [vmem:[%s193 + $0x350] sm:$0xff] %v562
        %691 = vst [vmem:[%s193 + $0x358] sm:$0xff] %v563
        %692 = vst [vmem:[%s193 + $0x360] sm:$0xff] %v564
        %693 = vst [vmem:[%s193 + $0x368] sm:$0xff] %v565
        %694 = vst [vmem:[%s193 + $0x370] sm:$0xff] %v566
        %695 = vst [vmem:[%s193 + $0x378] sm:$0xff] %v567
        %696 = vst [vmem:[%s193 + $0x380] sm:$0xff] %v568
        %697 = vst [vmem:[%s193 + $0x388] sm:$0xff] %v569
        %698 = vst [vmem:[%s193 + $0x390] sm:$0xff] %v570
        %699 = vst [vmem:[%s193 + $0x398] sm:$0xff] %v571
        %700 = vst [vmem:[%s193 + $0x3a0] sm:$0xff] %v572
        %701 = vst [vmem:[%s193 + $0x3a8] sm:$0xff] %v573
        %702 = vst [vmem:[%s193 + $0x3b0] sm:$0xff] %v574
        %703 = vst [vmem:[%s193 + $0x3b8] sm:$0xff] %v575
        %704 = vst [vmem:[%s193 + $0x3c0] sm:$0xff] %v576
        %705 = vst [vmem:[%s193 + $0x3c8] sm:$0xff] %v577
        %706 = vst [vmem:[%s193 + $0x3d0] sm:$0xff] %v578
        %707 = vst [vmem:[%s193 + $0x3d8] sm:$0xff] %v579
        %708 = vst [vmem:[%s193 + $0x3e0] sm:$0xff] %v580
        %709 = vst [vmem:[%s193 + $0x3e8] sm:$0xff] %v581
        %710 = vst [vmem:[%s193 + $0x3f0] sm:$0xff] %v582
        %711 = vst [vmem:[%s193 + $0x3f8] sm:$0xff] %v583
        %s712 = sand.u32 %s98, 1
        %s713 = scalar_lea.sflag [#allocation6], %s712
        %s714 = sand.u32 %s98, 1
        %s715 = smul.addr %s714, 1024
        %s716 = scalar_lea.vmem [#allocation7], %s715
        // Predicated region
        $region37: #{tpu_custom_call.1} parent=31 // pred_check
          %p717 = pneg %p108
        $region38: #{tpu_custom_call.1} parent=31 // pred_check_branch
          %719 = sbr.rel (%p717) target = $region40
        $region39: #{tpu_custom_call.1} parent=31 // pred_region
          %s720 = smul.u32 16, %s22
          %722 = vsyncadd %s713, 0
          %s723 = smul.addr %s720, 8
          %s724 = smul.addr %s723, 8
          %s725 = scalar_lea.hbm %s3, %s724
          %s726 = sshll.u32 %s716, 4
          %s727 = int_to_ptr.vmem [resolvable:$true] %s726
          %s728 = sshll.u32 %s725, 4
          %s729 = int_to_ptr.hbm [resolvable:$true] %s728
          %734 = dma.vmem_to_hbm [thread:$0]  %s727, 16384, %s729, %s713, 1024, 1024, 64
        $region40: #{tpu_custom_call.1} parent=31 // pred_fallthru
          _
      $region32: #{tpu_custom_call.1} parent=5 // pred_fallthru
        _
      %p735 = scmp.le.s32.totalorder 2, %s17
      // Predicated region
      $region41: #{tpu_custom_call.1} parent=5 // pred_check
        %p736 = pneg %p735
      $region42: #{tpu_custom_call.1} parent=5 // pred_check_branch
        %738 = sbr.rel (%p736) target = $region44
      $region43: #{tpu_custom_call.1} parent=5 // pred_region
        %s739 = ssub.s32 %s17, 2
        // Predicated region
        $region45: #{tpu_custom_call.1} parent=43 // pred_check
          %p740 = pneg %p114
        $region46: #{tpu_custom_call.1} parent=43 // pred_check_branch
          %742 = sbr.rel (%p740) target = $region48
        $region47: #{tpu_custom_call.1} parent=43 // pred_region
          %s743 = sand.u32 %s99, 1
          %s744 = scalar_lea.sflag [#allocation6], %s743
          %s745 = sand.u32 %s99, 1
          %s746 = smul.addr %s745, 1024
          %s747 = scalar_lea.vmem [#allocation7], %s746
          %749 = dma.done %s744, 16384
        $region48: #{tpu_custom_call.1} parent=43 // pred_fallthru
          _
      $region44: #{tpu_custom_call.1} parent=5 // pred_fallthru
        _
    $region6: #{tpu_custom_call.1} parent=1 // loop_footer
      %s21 = sadd.s32 1, %s17
    $region7: #{tpu_custom_call.1} parent=1 // loop_footer_branch
      %16 = sbr.rel target = $region3
    $region8: #{tpu_custom_call.1} parent=1 // loop_exit
      _
    %750 = vsyncpa [#allocation5], 1
    %s751 = scalar_lea.sflag [#allocation5], 1
    %752 = vsyncpa %s751, 1
    %753 = vsyncpa [#allocation6], 1
    %s754 = scalar_lea.sflag [#allocation6], 1
    %755 = vsyncpa %s754, 1

</llo_original>
